<compile_context>
chip_gen: v7x
topology: tpu7x:2x2x1
jax: 0.10.0
libtpu: 0.0.40
codegen_flags: <defaults>
</compile_context>

<pallas_src>
import functools

import jax
import jax.numpy as jnp
from jax.experimental import pallas as pl
from jax.experimental.pallas import tpu as pltpu


# ----------------------------- model dims (small, consistent with forward) ---
DICT_SIZE = 16   # vocabulary size
T = 8            # sequence length
B = 2            # batch
E = 32           # embedding dim
H = 32           # LSTM hidden dim
C = 4            # number of classes (decoder output)

SUBLANE = 8      # f32 sublane width
LANE = 128       # lane width


# ----------------------------- Pallas kernel ---------------------------------
def _lstm_classifier_kernel(x_ref, wih_ref, whh_ref, bias_ref, wdec_ref, bdec_ref,
                            out_ref, *, seq_len, batch_p):
    """Single grid-less invocation: hoisted input projection + recurrence + decoder.

    x_ref    : (T*Bp, E)   embedded tokens, time-major, batch padded & flattened
    wih_ref  : (E, 4H)     input->gate weights, gate order [i, f, o, g]
    whh_ref  : (H, 4H)     hidden->gate weights, gate order [i, f, o, g]
    bias_ref : (1, 4H)     combined bias (b_ih + b_hh), gate order [i, f, o, g]
    wdec_ref : (H, Cp)     decoder weights, lane-padded to Cp=128
    bdec_ref : (1, Cp)     decoder bias, lane-padded
    out_ref  : (Bp, Cp)    lane-dense logits slab
    """
    Hn = whh_ref.shape[0]
    Bp = batch_p

    # Time-invariant input projection + bias, hoisted off the serial critical
    # path: one (T*Bp, E) @ (E, 4H) MXU op covering every timestep at once.
    x_proj = (jnp.dot(x_ref[...], wih_ref[...],
                      preferred_element_type=jnp.float32)
              + bias_ref[...])                               # (T*Bp, 4H)

    w_hh = whh_ref[...]                                      # resident across loop

    h = jnp.zeros((Bp, Hn), jnp.float32)
    c = jnp.zeros((Bp, Hn), jnp.float32)

    # Static full unroll (seq_len is a small Python int); per-step serial chain:
    # h @ W_hh -> sigmoid/tanh (EUP) -> state update (VALU).
    for t in range(seq_len):
        gates = x_proj[t * Bp:(t + 1) * Bp, :] + jnp.dot(
            h, w_hh, preferred_element_type=jnp.float32)     # (Bp, 4H)
        # Gate order [i, f, o, g]: one sigmoid over 3H lanes, one tanh over H.
        sig = jax.nn.sigmoid(gates[:, :3 * Hn])
        g_g = jnp.tanh(gates[:, 3 * Hn:])
        i_g = sig[:, :Hn]
        f_g = sig[:, Hn:2 * Hn]
        o_g = sig[:, 2 * Hn:]
        c = f_g * c + i_g * g_g
        h = o_g * jnp.tanh(c)

    # LinearDecoder(hn): logits = hn @ W_dec + b_dec  (lane-dense padded store).
    out_ref[...] = (jnp.dot(h, wdec_ref[...], preferred_element_type=jnp.float32)
                    + bdec_ref[...]).astype(out_ref.dtype)


# ----------------------------- one-time weight preprocessing ------------------
def prepare_params(w_ih, w_hh, bias, w_dec, b_dec):
    """Hoisted out of the per-call hot path: reorder gate columns from PyTorch
    [i, f, g, o] to [i, f, o, g] and pad the decoder to a 128-lane slab."""
    def reorder_gates(m):
        i_, f_, g_, o_ = jnp.split(m, 4, axis=-1)
        return jnp.concatenate([i_, f_, o_, g_], axis=-1)

    Hn = w_hh.shape[0]
    Cn = w_dec.shape[1]
    Cp = max(LANE, ((Cn + LANE - 1) // LANE) * LANE)

    w_ih_r = reorder_gates(w_ih).astype(jnp.float32)
    w_hh_r = reorder_gates(w_hh).astype(jnp.float32)
    bias_r = reorder_gates(bias).astype(jnp.float32)
    w_dec_p = jnp.zeros((Hn, Cp), jnp.float32).at[:, :Cn].set(w_dec)
    b_dec_p = jnp.zeros((1, Cp), jnp.float32).at[:, :Cn].set(b_dec)
    return (w_ih_r, w_hh_r, bias_r, w_dec_p, b_dec_p)


# ----------------------------- per-call wrapper --------------------------------
@functools.partial(jax.jit, static_argnames=("num_classes",))
def lstm_classifier(x_emb, w_ih_r, w_hh_r, bias_r, w_dec_p, b_dec_p, *, num_classes):
    """x_emb: (T, B, E) f32 embedded sequence; weights pre-processed by
    prepare_params.  Returns (B, num_classes) f32 logits."""
    Tn, Bn, En = x_emb.shape
    Cp = w_dec_p.shape[1]

    Bp = max(SUBLANE, ((Bn + SUBLANE - 1) // SUBLANE) * SUBLANE)

    # Pad batch to the f32 sublane width and flatten time into the sublane dim
    # so the hoisted input projection is a single (T*Bp, E) matmul.
    x_pad = jnp.zeros((Tn, Bp, En), jnp.float32).at[:, :Bn, :].set(x_emb)
    x_flat = x_pad.reshape(Tn * Bp, En)

    kernel = functools.partial(_lstm_classifier_kernel, seq_len=Tn, batch_p=Bp)
    vmem_spec = lambda: pl.BlockSpec(memory_space=pltpu.MemorySpace.VMEM)

    out = pl.pallas_call(
        kernel,
        out_shape=jax.ShapeDtypeStruct((Bp, Cp), jnp.float32),
        in_specs=[vmem_spec() for _ in range(6)],
        out_specs=vmem_spec(),
    )(x_flat, w_ih_r, w_hh_r, bias_r, w_dec_p, b_dec_p)

    return out[:Bn, :num_classes]


# ----------------------------- pure-JAX reference -----------------------------
def reference(x_emb, w_ih, w_hh, bias, w_dec, b_dec):
    Hn = w_hh.shape[0]
    h = jnp.zeros((x_emb.shape[1], Hn), jnp.float32)
    c = jnp.zeros_like(h)
    for t in range(x_emb.shape[0]):
        gates = x_emb[t] @ w_ih + h @ w_hh + bias
        i_g = jax.nn.sigmoid(gates[:, 0 * Hn:1 * Hn])
        f_g = jax.nn.sigmoid(gates[:, 1 * Hn:2 * Hn])
        g_g = jnp.tanh(gates[:, 2 * Hn:3 * Hn])
        o_g = jax.nn.sigmoid(gates[:, 3 * Hn:4 * Hn])
        c = f_g * c + i_g * g_g
        h = o_g * jnp.tanh(c)
    return h @ w_dec + b_dec


# ----------------------------- driver -----------------------------------------
if __name__ == "__main__":
    key = jax.random.PRNGKey(0)
    k_tok, k_emb, k_ih, k_hh, k_b, k_wd, k_bd = jax.random.split(key, 7)

    # "sample": integer token ids (B, T), as the PyTorch encoder would receive.
    sample = jax.random.randint(k_tok, (B, T), 0, DICT_SIZE)

    # Deterministic parameter init (synthetic, not a checkpoint), PyTorch gate order.
    emb_table = 0.1 * jax.random.normal(k_emb, (DICT_SIZE, E), jnp.float32)
    w_ih = 0.1 * jax.random.normal(k_ih, (E, 4 * H), jnp.float32)
    w_hh = 0.1 * jax.random.normal(k_hh, (H, 4 * H), jnp.float32)
    bias = 0.1 * jax.random.normal(k_b, (1, 4 * H), jnp.float32)   # b_ih + b_hh folded
    w_dec = 0.1 * jax.random.normal(k_wd, (H, C), jnp.float32)
    b_dec = 0.1 * jax.random.normal(k_bd, (1, C), jnp.float32)

    # One-time weight prep (hoisted out of the per-call hot path).
    params = prepare_params(w_ih, w_hh, bias, w_dec, b_dec)
    params = jax.block_until_ready(params)

    # Embedding lookup (glue, plain JAX) -> time-major (T, B, E).
    x_emb = jnp.transpose(emb_table[sample], (1, 0, 2)).astype(jnp.float32)

    logits = lstm_classifier(x_emb, *params, num_classes=C)
    logits = jax.block_until_ready(logits)

    ref = reference(x_emb, w_ih, w_hh, bias, w_dec, b_dec)
    assert logits.shape == (B, C)
    assert jnp.allclose(logits, ref, atol=1e-4, rtol=1e-4)

    print("KERNEL_OK")
</pallas_src>

<mosaic_0001>
module attributes {stable_mosaic.version = 11 : i64} {
  func.func @_lstm_classifier_kernel(%arg0: memref<64x32xf32, #tpu.memory_space<vmem>>, %arg1: memref<32x128xf32, #tpu.memory_space<vmem>>, %arg2: memref<32x128xf32, #tpu.memory_space<vmem>>, %arg3: memref<1x128xf32, #tpu.memory_space<vmem>>, %arg4: memref<32x128xf32, #tpu.memory_space<vmem>>, %arg5: memref<1x128xf32, #tpu.memory_space<vmem>>, %arg6: memref<8x128xf32, #tpu.memory_space<vmem>>) attributes {dimension_semantics = [], scalar_prefetch = 0 : i64, scratch_operands = 0 : i64, tpu.core_type = #tpu.core_type<tc>} {
    %c0 = arith.constant 0 : index
    %c0_0 = arith.constant 0 : index
    %0 = vector.load %arg0[%c0, %c0_0] : memref<64x32xf32, #tpu.memory_space<vmem>>, vector<64x32xf32>
    %c0_1 = arith.constant 0 : index
    %c0_2 = arith.constant 0 : index
    %1 = vector.load %arg1[%c0_1, %c0_2] : memref<32x128xf32, #tpu.memory_space<vmem>>, vector<32x128xf32>
    %cst = arith.constant dense<0.000000e+00> : vector<64x128xf32>
    %2 = tpu.matmul %0, %1, %cst {dimension_numbers = #tpu.dot_dimension_numbers<[1], [0], [0], [1], [0, 0, 1, 1], [], []>} : vector<64x32xf32>, vector<32x128xf32>, vector<64x128xf32> -> vector<64x128xf32>
    %c0_3 = arith.constant 0 : index
    %c0_4 = arith.constant 0 : index
    %3 = vector.load %arg3[%c0_3, %c0_4] : memref<1x128xf32, #tpu.memory_space<vmem>>, vector<1x128xf32>
    %4 = vector.broadcast %3 : vector<1x128xf32> to vector<64x128xf32>
    %5 = arith.addf %2, %4 : vector<64x128xf32>
    %c0_5 = arith.constant 0 : index
    %c0_6 = arith.constant 0 : index
    %6 = vector.load %arg2[%c0_5, %c0_6] : memref<32x128xf32, #tpu.memory_space<vmem>>, vector<32x128xf32>
    %cst_7 = arith.constant 0.000000e+00 : f32
    %7 = vector.broadcast %cst_7 : f32 to vector<8x32xf32>
    %cst_8 = arith.constant 0.000000e+00 : f32
    %8 = vector.broadcast %cst_8 : f32 to vector<8x32xf32>
    %9 = vector.extract_strided_slice %5 {offsets = [0, 0], sizes = [8, 128], strides = [1, 1]} : vector<64x128xf32> to vector<8x128xf32>
    %cst_9 = arith.constant dense<0.000000e+00> : vector<8x128xf32>
    %10 = tpu.matmul %7, %6, %cst_9 {dimension_numbers = #tpu.dot_dimension_numbers<[1], [0], [0], [1], [0, 0, 1, 1], [], []>} : vector<8x32xf32>, vector<32x128xf32>, vector<8x128xf32> -> vector<8x128xf32>
    %11 = arith.addf %9, %10 : vector<8x128xf32>
    %12 = vector.extract_strided_slice %11 {offsets = [0, 0], sizes = [8, 96], strides = [1, 1]} : vector<8x128xf32> to vector<8x96xf32>
    %13 = arith.negf %12 : vector<8x96xf32>
    %14 = math.exp %13 : vector<8x96xf32>
    %cst_10 = arith.constant 1.000000e+00 : f32
    %15 = vector.broadcast %cst_10 : f32 to vector<8x96xf32>
    %16 = arith.addf %15, %14 : vector<8x96xf32>
    %17 = arith.divf %15, %16 : vector<8x96xf32>
    %18 = vector.extract_strided_slice %11 {offsets = [0, 96], sizes = [8, 32], strides = [1, 1]} : vector<8x128xf32> to vector<8x32xf32>
    %19 = math.tanh %18 : vector<8x32xf32>
    %20 = vector.extract_strided_slice %17 {offsets = [0, 0], sizes = [8, 32], strides = [1, 1]} : vector<8x96xf32> to vector<8x32xf32>
    %21 = vector.extract_strided_slice %17 {offsets = [0, 32], sizes = [8, 32], strides = [1, 1]} : vector<8x96xf32> to vector<8x32xf32>
    %22 = vector.extract_strided_slice %17 {offsets = [0, 64], sizes = [8, 32], strides = [1, 1]} : vector<8x96xf32> to vector<8x32xf32>
    %23 = arith.mulf %21, %8 : vector<8x32xf32>
    %24 = arith.mulf %20, %19 : vector<8x32xf32>
    %25 = arith.addf %23, %24 : vector<8x32xf32>
    %26 = math.tanh %25 : vector<8x32xf32>
    %27 = arith.mulf %22, %26 : vector<8x32xf32>
    %28 = vector.extract_strided_slice %5 {offsets = [8, 0], sizes = [8, 128], strides = [1, 1]} : vector<64x128xf32> to vector<8x128xf32>
    %cst_11 = arith.constant dense<0.000000e+00> : vector<8x128xf32>
    %29 = tpu.matmul %27, %6, %cst_11 {dimension_numbers = #tpu.dot_dimension_numbers<[1], [0], [0], [1], [0, 0, 1, 1], [], []>} : vector<8x32xf32>, vector<32x128xf32>, vector<8x128xf32> -> vector<8x128xf32>
    %30 = arith.addf %28, %29 : vector<8x128xf32>
    %31 = vector.extract_strided_slice %30 {offsets = [0, 0], sizes = [8, 96], strides = [1, 1]} : vector<8x128xf32> to vector<8x96xf32>
    %32 = arith.negf %31 : vector<8x96xf32>
    %33 = math.exp %32 : vector<8x96xf32>
    %cst_12 = arith.constant 1.000000e+00 : f32
    %34 = vector.broadcast %cst_12 : f32 to vector<8x96xf32>
    %35 = arith.addf %34, %33 : vector<8x96xf32>
    %36 = arith.divf %34, %35 : vector<8x96xf32>
    %37 = vector.extract_strided_slice %30 {offsets = [0, 96], sizes = [8, 32], strides = [1, 1]} : vector<8x128xf32> to vector<8x32xf32>
    %38 = math.tanh %37 : vector<8x32xf32>
    %39 = vector.extract_strided_slice %36 {offsets = [0, 0], sizes = [8, 32], strides = [1, 1]} : vector<8x96xf32> to vector<8x32xf32>
    %40 = vector.extract_strided_slice %36 {offsets = [0, 32], sizes = [8, 32], strides = [1, 1]} : vector<8x96xf32> to vector<8x32xf32>
    %41 = vector.extract_strided_slice %36 {offsets = [0, 64], sizes = [8, 32], strides = [1, 1]} : vector<8x96xf32> to vector<8x32xf32>
    %42 = arith.mulf %40, %25 : vector<8x32xf32>
    %43 = arith.mulf %39, %38 : vector<8x32xf32>
    %44 = arith.addf %42, %43 : vector<8x32xf32>
    %45 = math.tanh %44 : vector<8x32xf32>
    %46 = arith.mulf %41, %45 : vector<8x32xf32>
    %47 = vector.extract_strided_slice %5 {offsets = [16, 0], sizes = [8, 128], strides = [1, 1]} : vector<64x128xf32> to vector<8x128xf32>
    %cst_13 = arith.constant dense<0.000000e+00> : vector<8x128xf32>
    %48 = tpu.matmul %46, %6, %cst_13 {dimension_numbers = #tpu.dot_dimension_numbers<[1], [0], [0], [1], [0, 0, 1, 1], [], []>} : vector<8x32xf32>, vector<32x128xf32>, vector<8x128xf32> -> vector<8x128xf32>
    %49 = arith.addf %47, %48 : vector<8x128xf32>
    %50 = vector.extract_strided_slice %49 {offsets = [0, 0], sizes = [8, 96], strides = [1, 1]} : vector<8x128xf32> to vector<8x96xf32>
    %51 = arith.negf %50 : vector<8x96xf32>
    %52 = math.exp %51 : vector<8x96xf32>
    %cst_14 = arith.constant 1.000000e+00 : f32
    %53 = vector.broadcast %cst_14 : f32 to vector<8x96xf32>
    %54 = arith.addf %53, %52 : vector<8x96xf32>
    %55 = arith.divf %53, %54 : vector<8x96xf32>
    %56 = vector.extract_strided_slice %49 {offsets = [0, 96], sizes = [8, 32], strides = [1, 1]} : vector<8x128xf32> to vector<8x32xf32>
    %57 = math.tanh %56 : vector<8x32xf32>
    %58 = vector.extract_strided_slice %55 {offsets = [0, 0], sizes = [8, 32], strides = [1, 1]} : vector<8x96xf32> to vector<8x32xf32>
    %59 = vector.extract_strided_slice %55 {offsets = [0, 32], sizes = [8, 32], strides = [1, 1]} : vector<8x96xf32> to vector<8x32xf32>
    %60 = vector.extract_strided_slice %55 {offsets = [0, 64], sizes = [8, 32], strides = [1, 1]} : vector<8x96xf32> to vector<8x32xf32>
    %61 = arith.mulf %59, %44 : vector<8x32xf32>
    %62 = arith.mulf %58, %57 : vector<8x32xf32>
    %63 = arith.addf %61, %62 : vector<8x32xf32>
    %64 = math.tanh %63 : vector<8x32xf32>
    %65 = arith.mulf %60, %64 : vector<8x32xf32>
    %66 = vector.extract_strided_slice %5 {offsets = [24, 0], sizes = [8, 128], strides = [1, 1]} : vector<64x128xf32> to vector<8x128xf32>
    %cst_15 = arith.constant dense<0.000000e+00> : vector<8x128xf32>
    %67 = tpu.matmul %65, %6, %cst_15 {dimension_numbers = #tpu.dot_dimension_numbers<[1], [0], [0], [1], [0, 0, 1, 1], [], []>} : vector<8x32xf32>, vector<32x128xf32>, vector<8x128xf32> -> vector<8x128xf32>
    %68 = arith.addf %66, %67 : vector<8x128xf32>
    %69 = vector.extract_strided_slice %68 {offsets = [0, 0], sizes = [8, 96], strides = [1, 1]} : vector<8x128xf32> to vector<8x96xf32>
    %70 = arith.negf %69 : vector<8x96xf32>
    %71 = math.exp %70 : vector<8x96xf32>
    %cst_16 = arith.constant 1.000000e+00 : f32
    %72 = vector.broadcast %cst_16 : f32 to vector<8x96xf32>
    %73 = arith.addf %72, %71 : vector<8x96xf32>
    %74 = arith.divf %72, %73 : vector<8x96xf32>
    %75 = vector.extract_strided_slice %68 {offsets = [0, 96], sizes = [8, 32], strides = [1, 1]} : vector<8x128xf32> to vector<8x32xf32>
    %76 = math.tanh %75 : vector<8x32xf32>
    %77 = vector.extract_strided_slice %74 {offsets = [0, 0], sizes = [8, 32], strides = [1, 1]} : vector<8x96xf32> to vector<8x32xf32>
    %78 = vector.extract_strided_slice %74 {offsets = [0, 32], sizes = [8, 32], strides = [1, 1]} : vector<8x96xf32> to vector<8x32xf32>
    %79 = vector.extract_strided_slice %74 {offsets = [0, 64], sizes = [8, 32], strides = [1, 1]} : vector<8x96xf32> to vector<8x32xf32>
    %80 = arith.mulf %78, %63 : vector<8x32xf32>
    %81 = arith.mulf %77, %76 : vector<8x32xf32>
    %82 = arith.addf %80, %81 : vector<8x32xf32>
    %83 = math.tanh %82 : vector<8x32xf32>
    %84 = arith.mulf %79, %83 : vector<8x32xf32>
    %85 = vector.extract_strided_slice %5 {offsets = [32, 0], sizes = [8, 128], strides = [1, 1]} : vector<64x128xf32> to vector<8x128xf32>
    %cst_17 = arith.constant dense<0.000000e+00> : vector<8x128xf32>
    %86 = tpu.matmul %84, %6, %cst_17 {dimension_numbers = #tpu.dot_dimension_numbers<[1], [0], [0], [1], [0, 0, 1, 1], [], []>} : vector<8x32xf32>, vector<32x128xf32>, vector<8x128xf32> -> vector<8x128xf32>
    %87 = arith.addf %85, %86 : vector<8x128xf32>
    %88 = vector.extract_strided_slice %87 {offsets = [0, 0], sizes = [8, 96], strides = [1, 1]} : vector<8x128xf32> to vector<8x96xf32>
    %89 = arith.negf %88 : vector<8x96xf32>
    %90 = math.exp %89 : vector<8x96xf32>
    %cst_18 = arith.constant 1.000000e+00 : f32
    %91 = vector.broadcast %cst_18 : f32 to vector<8x96xf32>
    %92 = arith.addf %91, %90 : vector<8x96xf32>
    %93 = arith.divf %91, %92 : vector<8x96xf32>
    %94 = vector.extract_strided_slice %87 {offsets = [0, 96], sizes = [8, 32], strides = [1, 1]} : vector<8x128xf32> to vector<8x32xf32>
    %95 = math.tanh %94 : vector<8x32xf32>
    %96 = vector.extract_strided_slice %93 {offsets = [0, 0], sizes = [8, 32], strides = [1, 1]} : vector<8x96xf32> to vector<8x32xf32>
    %97 = vector.extract_strided_slice %93 {offsets = [0, 32], sizes = [8, 32], strides = [1, 1]} : vector<8x96xf32> to vector<8x32xf32>
    %98 = vector.extract_strided_slice %93 {offsets = [0, 64], sizes = [8, 32], strides = [1, 1]} : vector<8x96xf32> to vector<8x32xf32>
    %99 = arith.mulf %97, %82 : vector<8x32xf32>
    %100 = arith.mulf %96, %95 : vector<8x32xf32>
    %101 = arith.addf %99, %100 : vector<8x32xf32>
    %102 = math.tanh %101 : vector<8x32xf32>
    %103 = arith.mulf %98, %102 : vector<8x32xf32>
    %104 = vector.extract_strided_slice %5 {offsets = [40, 0], sizes = [8, 128], strides = [1, 1]} : vector<64x128xf32> to vector<8x128xf32>
    %cst_19 = arith.constant dense<0.000000e+00> : vector<8x128xf32>
    %105 = tpu.matmul %103, %6, %cst_19 {dimension_numbers = #tpu.dot_dimension_numbers<[1], [0], [0], [1], [0, 0, 1, 1], [], []>} : vector<8x32xf32>, vector<32x128xf32>, vector<8x128xf32> -> vector<8x128xf32>
    %106 = arith.addf %104, %105 : vector<8x128xf32>
    %107 = vector.extract_strided_slice %106 {offsets = [0, 0], sizes = [8, 96], strides = [1, 1]} : vector<8x128xf32> to vector<8x96xf32>
    %108 = arith.negf %107 : vector<8x96xf32>
    %109 = math.exp %108 : vector<8x96xf32>
    %cst_20 = arith.constant 1.000000e+00 : f32
    %110 = vector.broadcast %cst_20 : f32 to vector<8x96xf32>
    %111 = arith.addf %110, %109 : vector<8x96xf32>
    %112 = arith.divf %110, %111 : vector<8x96xf32>
    %113 = vector.extract_strided_slice %106 {offsets = [0, 96], sizes = [8, 32], strides = [1, 1]} : vector<8x128xf32> to vector<8x32xf32>
    %114 = math.tanh %113 : vector<8x32xf32>
    %115 = vector.extract_strided_slice %112 {offsets = [0, 0], sizes = [8, 32], strides = [1, 1]} : vector<8x96xf32> to vector<8x32xf32>
    %116 = vector.extract_strided_slice %112 {offsets = [0, 32], sizes = [8, 32], strides = [1, 1]} : vector<8x96xf32> to vector<8x32xf32>
    %117 = vector.extract_strided_slice %112 {offsets = [0, 64], sizes = [8, 32], strides = [1, 1]} : vector<8x96xf32> to vector<8x32xf32>
    %118 = arith.mulf %116, %101 : vector<8x32xf32>
    %119 = arith.mulf %115, %114 : vector<8x32xf32>
    %120 = arith.addf %118, %119 : vector<8x32xf32>
    %121 = math.tanh %120 : vector<8x32xf32>
    %122 = arith.mulf %117, %121 : vector<8x32xf32>
    %123 = vector.extract_strided_slice %5 {offsets = [48, 0], sizes = [8, 128], strides = [1, 1]} : vector<64x128xf32> to vector<8x128xf32>
    %cst_21 = arith.constant dense<0.000000e+00> : vector<8x128xf32>
    %124 = tpu.matmul %122, %6, %cst_21 {dimension_numbers = #tpu.dot_dimension_numbers<[1], [0], [0], [1], [0, 0, 1, 1], [], []>} : vector<8x32xf32>, vector<32x128xf32>, vector<8x128xf32> -> vector<8x128xf32>
    %125 = arith.addf %123, %124 : vector<8x128xf32>
    %126 = vector.extract_strided_slice %125 {offsets = [0, 0], sizes = [8, 96], strides = [1, 1]} : vector<8x128xf32> to vector<8x96xf32>
    %127 = arith.negf %126 : vector<8x96xf32>
    %128 = math.exp %127 : vector<8x96xf32>
    %cst_22 = arith.constant 1.000000e+00 : f32
    %129 = vector.broadcast %cst_22 : f32 to vector<8x96xf32>
    %130 = arith.addf %129, %128 : vector<8x96xf32>
    %131 = arith.divf %129, %130 : vector<8x96xf32>
    %132 = vector.extract_strided_slice %125 {offsets = [0, 96], sizes = [8, 32], strides = [1, 1]} : vector<8x128xf32> to vector<8x32xf32>
    %133 = math.tanh %132 : vector<8x32xf32>
    %134 = vector.extract_strided_slice %131 {offsets = [0, 0], sizes = [8, 32], strides = [1, 1]} : vector<8x96xf32> to vector<8x32xf32>
    %135 = vector.extract_strided_slice %131 {offsets = [0, 32], sizes = [8, 32], strides = [1, 1]} : vector<8x96xf32> to vector<8x32xf32>
    %136 = vector.extract_strided_slice %131 {offsets = [0, 64], sizes = [8, 32], strides = [1, 1]} : vector<8x96xf32> to vector<8x32xf32>
    %137 = arith.mulf %135, %120 : vector<8x32xf32>
    %138 = arith.mulf %134, %133 : vector<8x32xf32>
    %139 = arith.addf %137, %138 : vector<8x32xf32>
    %140 = math.tanh %139 : vector<8x32xf32>
    %141 = arith.mulf %136, %140 : vector<8x32xf32>
    %142 = vector.extract_strided_slice %5 {offsets = [56, 0], sizes = [8, 128], strides = [1, 1]} : vector<64x128xf32> to vector<8x128xf32>
    %cst_23 = arith.constant dense<0.000000e+00> : vector<8x128xf32>
    %143 = tpu.matmul %141, %6, %cst_23 {dimension_numbers = #tpu.dot_dimension_numbers<[1], [0], [0], [1], [0, 0, 1, 1], [], []>} : vector<8x32xf32>, vector<32x128xf32>, vector<8x128xf32> -> vector<8x128xf32>
    %144 = arith.addf %142, %143 : vector<8x128xf32>
    %145 = vector.extract_strided_slice %144 {offsets = [0, 0], sizes = [8, 96], strides = [1, 1]} : vector<8x128xf32> to vector<8x96xf32>
    %146 = arith.negf %145 : vector<8x96xf32>
    %147 = math.exp %146 : vector<8x96xf32>
    %cst_24 = arith.constant 1.000000e+00 : f32
    %148 = vector.broadcast %cst_24 : f32 to vector<8x96xf32>
    %149 = arith.addf %148, %147 : vector<8x96xf32>
    %150 = arith.divf %148, %149 : vector<8x96xf32>
    %151 = vector.extract_strided_slice %144 {offsets = [0, 96], sizes = [8, 32], strides = [1, 1]} : vector<8x128xf32> to vector<8x32xf32>
    %152 = math.tanh %151 : vector<8x32xf32>
    %153 = vector.extract_strided_slice %150 {offsets = [0, 0], sizes = [8, 32], strides = [1, 1]} : vector<8x96xf32> to vector<8x32xf32>
    %154 = vector.extract_strided_slice %150 {offsets = [0, 32], sizes = [8, 32], strides = [1, 1]} : vector<8x96xf32> to vector<8x32xf32>
    %155 = vector.extract_strided_slice %150 {offsets = [0, 64], sizes = [8, 32], strides = [1, 1]} : vector<8x96xf32> to vector<8x32xf32>
    %156 = arith.mulf %154, %139 : vector<8x32xf32>
    %157 = arith.mulf %153, %152 : vector<8x32xf32>
    %158 = arith.addf %156, %157 : vector<8x32xf32>
    %159 = math.tanh %158 : vector<8x32xf32>
    %160 = arith.mulf %155, %159 : vector<8x32xf32>
    %c0_25 = arith.constant 0 : index
    %c0_26 = arith.constant 0 : index
    %161 = vector.load %arg4[%c0_25, %c0_26] : memref<32x128xf32, #tpu.memory_space<vmem>>, vector<32x128xf32>
    %cst_27 = arith.constant dense<0.000000e+00> : vector<8x128xf32>
    %162 = tpu.matmul %160, %161, %cst_27 {dimension_numbers = #tpu.dot_dimension_numbers<[1], [0], [0], [1], [0, 0, 1, 1], [], []>} : vector<8x32xf32>, vector<32x128xf32>, vector<8x128xf32> -> vector<8x128xf32>
    %c0_28 = arith.constant 0 : index
    %c0_29 = arith.constant 0 : index
    %163 = vector.load %arg5[%c0_28, %c0_29] : memref<1x128xf32, #tpu.memory_space<vmem>>, vector<1x128xf32>
    %164 = vector.broadcast %163 : vector<1x128xf32> to vector<8x128xf32>
    %165 = arith.addf %162, %164 : vector<8x128xf32>
    %c0_30 = arith.constant 0 : index
    %c0_31 = arith.constant 0 : index
    %166 = vector.load %arg6[%c0_30, %c0_31] : memref<8x128xf32, #tpu.memory_space<vmem>>, vector<8x128xf32>
    tpu.vector_store %arg6[%c0_30, %c0_31], %165 {strides = array<i32>} : memref<8x128xf32, #tpu.memory_space<vmem>>, vector<8x128xf32>,
    return
  }
}

</mosaic_0001>

<llo_original>
// kernel: lstm_classifier.1
$region0: #{lstm_classifier.1}
  #allocation0 [shape = 'u32[]', space=smem, size = 0x4, offset = 0x4, fixed_abs, tag = 'smem constant byte address 0x4 - core index']
  #allocation1 [shape = 'u32[144,128]{1,0:T(1,128)}', space=vmem, size = 0x12000, scoped, tag = 'internal scratch']
  %s0 = inlined_call_operand.vmem [shape: f32[64,32], index: 0, kind: input, shape index: {}]
  %s1 = inlined_call_operand.vmem [shape: f32[32,128], index: 1, kind: input, shape index: {}]
  %s2 = inlined_call_operand.vmem [shape: f32[32,128], index: 2, kind: input, shape index: {}]
  %s3 = inlined_call_operand.vmem [shape: f32[1,128], index: 3, kind: input, shape index: {}]
  %s4 = inlined_call_operand.hbm [shape: f32[32,128], index: 4, kind: input, shape index: {}]
  %s5 = inlined_call_operand.vmem [shape: f32[1,128], index: 5, kind: input, shape index: {}]
  %s6 = inlined_call_operand.vmem [shape: f32[8,128], index: 6, kind: output, shape index: {}]
  %s7 = sld [smem:[#allocation0]]
  $region38: #{lstm_classifier.1} parent=0
    _
  %s9 = ssub.s32 1, %s7
  %s10 = scalar_select 0, %s9, %s7
  $region1: #{lstm_classifier.1} parent=0
    #allocation2 [shape = 'u8[16384]{0}', space=vmem, size = 0x4000, scoped, tag = 'input window, operand 4, single buffered']
    #allocation3 [shape = 's32[1]{0}', space=sflag, size = 0x4, scoped, tag = 'scoped memory for lstm_classifier.1']
    %11 = vsyncpa [#allocation3], 0
    // Predicated region
    $region2: #{lstm_classifier.1} parent=1 // pred_check
      _
    $region3: #{lstm_classifier.1} parent=1 // pred_check_branch
      %13 = sbr.rel (0) target = $region5
    $region4: #{lstm_classifier.1} parent=1 // pred_region
      _
    $region5: #{lstm_classifier.1} parent=1 // pred_fallthru
      _
    // Predicated region
    $region6: #{lstm_classifier.1} parent=1 // pred_check
      _
    $region7: #{lstm_classifier.1} parent=1 // pred_check_branch
      %15 = sbr.rel (0) target = $region9
    $region8: #{lstm_classifier.1} parent=1 // pred_region
      _
    $region9: #{lstm_classifier.1} parent=1 // pred_fallthru
      _
    // Predicated region
    $region10: #{lstm_classifier.1} parent=1 // pred_check
      _
    $region11: #{lstm_classifier.1} parent=1 // pred_check_branch
      %17 = sbr.rel (0) target = $region13
    $region12: #{lstm_classifier.1} parent=1 // pred_region
      _
    $region13: #{lstm_classifier.1} parent=1 // pred_fallthru
      _
    // Predicated region
    $region14: #{lstm_classifier.1} parent=1 // pred_check
      _
    $region15: #{lstm_classifier.1} parent=1 // pred_check_branch
      %19 = sbr.rel (0) target = $region17
    $region16: #{lstm_classifier.1} parent=1 // pred_region
      _
    $region17: #{lstm_classifier.1} parent=1 // pred_fallthru
      _
    // Predicated region
    $region18: #{lstm_classifier.1} parent=1 // pred_check
      _
    $region19: #{lstm_classifier.1} parent=1 // pred_check_branch
      %21 = sbr.rel (0) target = $region21
    $region20: #{lstm_classifier.1} parent=1 // pred_region
      %s23 = ssub.s32 512, 512
      %24 = vsyncadd [#allocation3], %s23
      %s25 = sshll.u32 [#allocation2], 4
      %s26 = int_to_ptr.vmem [resolvable:$true] %s25
      %31 = dma.hbm_to_vmem [thread:$0]  %s4, 512, %s26, [#allocation3], 128, 128, 8
    $region21: #{lstm_classifier.1} parent=1 // pred_fallthru
      _
    // Predicated region
    $region22: #{lstm_classifier.1} parent=1 // pred_check
      _
    $region23: #{lstm_classifier.1} parent=1 // pred_check_branch
      %33 = sbr.rel (0) target = $region25
    $region24: #{lstm_classifier.1} parent=1 // pred_region
      _
    $region25: #{lstm_classifier.1} parent=1 // pred_fallthru
      _
    // Predicated region
    $region26: #{lstm_classifier.1} parent=1 // pred_check
      _
    $region27: #{lstm_classifier.1} parent=1 // pred_check_branch
      %35 = sbr.rel (0) target = $region29
    $region28: #{lstm_classifier.1} parent=1 // pred_region
      %36 = dma.done [#allocation3], 512
    $region29: #{lstm_classifier.1} parent=1 // pred_fallthru
      _
    %v37 = vld [vmem:[%s0] sm:$0xff]
    %v38 = vld [vmem:[%s0 + $0x8] sm:$0xff]
    %v39 = vld [vmem:[%s0 + $0x10] sm:$0xff]
    %v40 = vld [vmem:[%s0 + $0x18] sm:$0xff]
    %v41 = vld [vmem:[%s0 + $0x20] sm:$0xff]
    %v42 = vld [vmem:[%s0 + $0x28] sm:$0xff]
    %v43 = vld [vmem:[%s0 + $0x30] sm:$0xff]
    %v44 = vld [vmem:[%s0 + $0x38] sm:$0xff]
    %v45 = vld [vmem:[%s1] sm:$0xff]
    %v46 = vld [vmem:[%s1 + $0x8] sm:$0xff]
    %v47 = vld [vmem:[%s1 + $0x10] sm:$0xff]
    %v48 = vld [vmem:[%s1 + $0x18] sm:$0xff]
    %v49 = vld [vmem:[%s3] sm:$0x1]
    %v51 = vlaneseq
    %v52 = vshrl.u32 %v51, 7
    %v53 = vsub.s32 0, %v52
    %v54 = vrot.slane %v49, %v53
    %vm56 = vcmask 261120
    %v58 = vsel %vm56, %v37, 0
    %v61 = vsel %vm56, %v38, 0
    %v64 = vsel %vm56, %v39, 0
    %v67 = vsel %vm56, %v40, 0
    %v70 = vsel %vm56, %v41, 0
    %v73 = vsel %vm56, %v42, 0
    %v76 = vsel %vm56, %v43, 0
    %v79 = vsel %vm56, %v44, 0
    %81 = vmatprep.subr.mxu0 0.0
    %82 = vmatpush1.msra.mxu0 %v45
    %83 = vmatprep.subr.mxu0 0.0
    %84 = vmatpush1.msra.mxu0 %v46
    %85 = vmatprep.subr.mxu0 0.0
    %86 = vmatpush1.msra.mxu0 %v47
    %87 = vmatprep.subr.mxu0 0.0
    %88 = vmatpush1.msra.mxu0 %v48
    %89 = vmatprep.subr.mxu0 0.0
    %90 = vmatpush1.msra.mxu0 0.0
    %91 = vmatprep.subr.mxu0 0.0
    %92 = vmatpush1.msra.mxu0 0.0
    %93 = vmatprep.subr.mxu0 0.0
    %94 = vmatpush1.msra.mxu0 0.0
    %95 = vmatprep.subr.mxu0 0.0
    %96 = vmatpush1.msra.mxu0 0.0
    %97 = vmatprep.subr.mxu0 0.0
    %98 = vmatpush1.msra.mxu0 0.0
    %99 = vmatprep.subr.mxu0 0.0
    %100 = vmatpush1.msra.mxu0 0.0
    %101 = vmatprep.subr.mxu0 0.0
    %102 = vmatpush1.msra.mxu0 0.0
    %103 = vmatprep.subr.mxu0 0.0
    %104 = vmatpush1.msra.mxu0 0.0
    %105 = vmatprep.subr.mxu0 0.0
    %106 = vmatpush1.msra.mxu0 0.0
    %107 = vmatprep.subr.mxu0 0.0
    %108 = vmatpush1.msra.mxu0 0.0
    %109 = vmatprep.subr.mxu0 0.0
    %110 = vmatpush1.msra.mxu0 0.0
    %111 = vmatprep.subr.mxu0 0.0
    %112 = vmatpush1.msra.mxu0 0.0
    %113 = vmatprep.subr.mxu0 0.0
    %114 = vmatpush1.msra.mxu0 0.0
    %115 = vmatprep.subr.mxu0 0.0
    %116 = vmatpush1.msra.mxu0 0.0
    %117 = vmatprep.subr.mxu0 0.0
    %118 = vmatpush1.msra.mxu0 0.0
    %119 = vmatprep.subr.mxu0 0.0
    %120 = vmatpush1.msra.mxu0 0.0
    %121 = vmatprep.subr.mxu0 0.0
    %122 = vmatpush1.msra.mxu0 0.0
    %123 = vmatprep.subr.mxu0 0.0
    %124 = vmatpush1.msra.mxu0 0.0
    %125 = vmatprep.subr.mxu0 0.0
    %126 = vmatpush1.msra.mxu0 0.0
    %127 = vmatprep.subr.mxu0 0.0
    %128 = vmatpush1.msra.mxu0 0.0
    %129 = vmatprep.subr.mxu0 0.0
    %130 = vmatpush1.msra.mxu0 0.0
    %131 = vmatprep.subr.mxu0 0.0
    %132 = vmatpush1.msra.mxu0 0.0
    %133 = vmatprep.subr.mxu0 0.0
    %134 = vmatpush1.msra.mxu0 0.0
    %135 = vmatprep.subr.mxu0 0.0
    %136 = vmatpush1.msra.mxu0 0.0
    %137 = vmatprep.subr.mxu0 0.0
    %138 = vmatpush1.msra.mxu0 0.0
    %139 = vmatprep.subr.mxu0 0.0
    %140 = vmatpush1.msra.mxu0 0.0
    %141 = vmatprep.subr.mxu0 0.0
    %142 = vmatpush1.msra.mxu0 0.0
    %143 = vmatprep.subr.mxu0 0.0
    %144 = vmatpush1.msra.mxu0 0.0
    %145 = vmatprep.mubr.f32.mxu0 0.0
    %146 = vmatmul.mubr.f32.gmra.mrb[0].mxu0 %v58
    %v147 = vpop.f32.mrb[0].mxu0
    %v148 = vadd.f32 %v54, %v147
    %v149 = vpop.f32.mrb[0].mxu0
    %150 = vmatprep.mubr.f32.mxu0 0.0
    %151 = vmatmul.mubr.f32.gmra.mrb[0].mxu0 %v61
    %v152 = vpop.f32.mrb[0].mxu0
    %v153 = vadd.f32 %v54, %v152
    %v154 = vpop.f32.mrb[0].mxu0
    %155 = vmatprep.mubr.f32.mxu0 0.0
    %156 = vmatmul.mubr.f32.gmra.mrb[0].mxu0 %v64
    %v157 = vpop.f32.mrb[0].mxu0
    %v158 = vadd.f32 %v54, %v157
    %v159 = vpop.f32.mrb[0].mxu0
    %160 = vmatprep.mubr.f32.mxu0 0.0
    %161 = vmatmul.mubr.f32.gmra.mrb[0].mxu0 %v67
    %v162 = vpop.f32.mrb[0].mxu0
    %v163 = vadd.f32 %v54, %v162
    %v164 = vpop.f32.mrb[0].mxu0
    %165 = vmatprep.mubr.f32.mxu0 0.0
    %166 = vmatmul.mubr.f32.gmra.mrb[0].mxu0 %v70
    %v167 = vpop.f32.mrb[0].mxu0
    %v168 = vadd.f32 %v54, %v167
    %v169 = vpop.f32.mrb[0].mxu0
    %170 = vmatprep.mubr.f32.mxu0 0.0
    %171 = vmatmul.mubr.f32.gmra.mrb[0].mxu0 %v73
    %v172 = vpop.f32.mrb[0].mxu0
    %v173 = vadd.f32 %v54, %v172
    %v174 = vpop.f32.mrb[0].mxu0
    %175 = vmatprep.mubr.f32.mxu0 0.0
    %176 = vmatmul.mubr.f32.gmra.mrb[0].mxu0 %v76
    %v177 = vpop.f32.mrb[0].mxu0
    %v178 = vadd.f32 %v54, %v177
    %v179 = vpop.f32.mrb[0].mxu0
    %180 = vmatprep.mubr.f32.mxu0 0.0
    %181 = vmatmul.mubr.f32.gmra.mrb[0].mxu0 %v79
    %v182 = vpop.f32.mrb[0].mxu0
    %v183 = vadd.f32 %v54, %v182
    %v184 = vpop.f32.mrb[0].mxu0
    %185 = vdwg.mxu0
    %v186 = vld [vmem:[%s2] sm:$0xff]
    %v187 = vld [vmem:[%s2 + $0x8] sm:$0xff]
    %v188 = vld [vmem:[%s2 + $0x10] sm:$0xff]
    %v189 = vld [vmem:[%s2 + $0x18] sm:$0xff]
    %v191 = vsel %vm56, 0.0, 0
    %193 = vmatprep.subr.mxu0 0.0
    %194 = vmatpush1.msra.mxu0 %v186
    %195 = vmatprep.subr.mxu0 0.0
    %196 = vmatpush1.msra.mxu0 %v187
    %197 = vmatprep.subr.mxu0 0.0
    %198 = vmatpush1.msra.mxu0 %v188
    %199 = vmatprep.subr.mxu0 0.0
    %200 = vmatpush1.msra.mxu0 %v189
    %201 = vmatprep.subr.mxu0 0.0
    %202 = vmatpush1.msra.mxu0 0.0
    %203 = vmatprep.subr.mxu0 0.0
    %204 = vmatpush1.msra.mxu0 0.0
    %205 = vmatprep.subr.mxu0 0.0
    %206 = vmatpush1.msra.mxu0 0.0
    %207 = vmatprep.subr.mxu0 0.0
    %208 = vmatpush1.msra.mxu0 0.0
    %209 = vmatprep.subr.mxu0 0.0
    %210 = vmatpush1.msra.mxu0 0.0
    %211 = vmatprep.subr.mxu0 0.0
    %212 = vmatpush1.msra.mxu0 0.0
    %213 = vmatprep.subr.mxu0 0.0
    %214 = vmatpush1.msra.mxu0 0.0
    %215 = vmatprep.subr.mxu0 0.0
    %216 = vmatpush1.msra.mxu0 0.0
    %217 = vmatprep.subr.mxu0 0.0
    %218 = vmatpush1.msra.mxu0 0.0
    %219 = vmatprep.subr.mxu0 0.0
    %220 = vmatpush1.msra.mxu0 0.0
    %221 = vmatprep.subr.mxu0 0.0
    %222 = vmatpush1.msra.mxu0 0.0
    %223 = vmatprep.subr.mxu0 0.0
    %224 = vmatpush1.msra.mxu0 0.0
    %225 = vmatprep.subr.mxu0 0.0
    %226 = vmatpush1.msra.mxu0 0.0
    %227 = vmatprep.subr.mxu0 0.0
    %228 = vmatpush1.msra.mxu0 0.0
    %229 = vmatprep.subr.mxu0 0.0
    %230 = vmatpush1.msra.mxu0 0.0
    %231 = vmatprep.subr.mxu0 0.0
    %232 = vmatpush1.msra.mxu0 0.0
    %233 = vmatprep.subr.mxu0 0.0
    %234 = vmatpush1.msra.mxu0 0.0
    %235 = vmatprep.subr.mxu0 0.0
    %236 = vmatpush1.msra.mxu0 0.0
    %237 = vmatprep.subr.mxu0 0.0
    %238 = vmatpush1.msra.mxu0 0.0
    %239 = vmatprep.subr.mxu0 0.0
    %240 = vmatpush1.msra.mxu0 0.0
    %241 = vmatprep.subr.mxu0 0.0
    %242 = vmatpush1.msra.mxu0 0.0
    %243 = vmatprep.subr.mxu0 0.0
    %244 = vmatpush1.msra.mxu0 0.0
    %245 = vmatprep.subr.mxu0 0.0
    %246 = vmatpush1.msra.mxu0 0.0
    %247 = vmatprep.subr.mxu0 0.0
    %248 = vmatpush1.msra.mxu0 0.0
    %249 = vmatprep.subr.mxu0 0.0
    %250 = vmatpush1.msra.mxu0 0.0
    %251 = vmatprep.subr.mxu0 0.0
    %252 = vmatpush1.msra.mxu0 0.0
    %253 = vmatprep.subr.mxu0 0.0
    %254 = vmatpush1.msra.mxu0 0.0
    %255 = vmatprep.subr.mxu0 0.0
    %256 = vmatpush1.msra.mxu0 0.0
    %257 = vmatprep.mubr.f32.mxu0 0.0
    %258 = vmatmul.mubr.f32.gmra.mrb[0].mxu0 %v191
    %v259 = vpop.f32.mrb[0].mxu0
    %v260 = vadd.f32 0.0, %v259
    %v261 = vpop.f32.mrb[0].mxu0
    %262 = vdwg.mxu0
    %v263 = vadd.f32 %v148, %v260
    %v264 = vxor.u32 %v263, 2147483648
    %v265 = vmul.f32 %v264, 1.442695
    %v266 = vpow.pop %v265
    %v267 = vadd.f32 %v266, 1.0
    %v268 = vrcp.pop %v267
    %v269 = vmul.f32 1.0, %v268
    %v270 = vtanh.pop %v263
    %v271 = vmul.f32 %v269, 0.0
    %273 = vrot.lane.b32.xlu0 %v270, 32
    %v274 = vpop.permute.xlu0 %273
    %v276 = vmul.f32 %v269, %v274
    %278 = vrot.lane.b32.xlu0 %v276, 32
    %v279 = vpop.permute.xlu0 %278
    %v281 = vadd.f32 %v271, %v279
    %v282 = vtanh.pop %v281
    %284 = vrot.lane.b32.xlu0 %v282, 32
    %v285 = vpop.permute.xlu0 %284
    %v287 = vmul.f32 %v269, %v285
    %289 = vrot.lane.b32.xlu0 %v287, 64
    %v290 = vpop.permute.xlu0 %289
    %v291 = vsel %vm56, %v290, 0
    %293 = vmatprep.subr.mxu0 0.0
    %294 = vmatpush1.msra.mxu0 %v186
    %295 = vmatprep.subr.mxu0 0.0
    %296 = vmatpush1.msra.mxu0 %v187
    %297 = vmatprep.subr.mxu0 0.0
    %298 = vmatpush1.msra.mxu0 %v188
    %299 = vmatprep.subr.mxu0 0.0
    %300 = vmatpush1.msra.mxu0 %v189
    %301 = vmatprep.subr.mxu0 0.0
    %302 = vmatpush1.msra.mxu0 0.0
    %303 = vmatprep.subr.mxu0 0.0
    %304 = vmatpush1.msra.mxu0 0.0
    %305 = vmatprep.subr.mxu0 0.0
    %306 = vmatpush1.msra.mxu0 0.0
    %307 = vmatprep.subr.mxu0 0.0
    %308 = vmatpush1.msra.mxu0 0.0
    %309 = vmatprep.subr.mxu0 0.0
    %310 = vmatpush1.msra.mxu0 0.0
    %311 = vmatprep.subr.mxu0 0.0
    %312 = vmatpush1.msra.mxu0 0.0
    %313 = vmatprep.subr.mxu0 0.0
    %314 = vmatpush1.msra.mxu0 0.0
    %315 = vmatprep.subr.mxu0 0.0
    %316 = vmatpush1.msra.mxu0 0.0
    %317 = vmatprep.subr.mxu0 0.0
    %318 = vmatpush1.msra.mxu0 0.0
    %319 = vmatprep.subr.mxu0 0.0
    %320 = vmatpush1.msra.mxu0 0.0
    %321 = vmatprep.subr.mxu0 0.0
    %322 = vmatpush1.msra.mxu0 0.0
    %323 = vmatprep.subr.mxu0 0.0
    %324 = vmatpush1.msra.mxu0 0.0
    %325 = vmatprep.subr.mxu0 0.0
    %326 = vmatpush1.msra.mxu0 0.0
    %327 = vmatprep.subr.mxu0 0.0
    %328 = vmatpush1.msra.mxu0 0.0
    %329 = vmatprep.subr.mxu0 0.0
    %330 = vmatpush1.msra.mxu0 0.0
    %331 = vmatprep.subr.mxu0 0.0
    %332 = vmatpush1.msra.mxu0 0.0
    %333 = vmatprep.subr.mxu0 0.0
    %334 = vmatpush1.msra.mxu0 0.0
    %335 = vmatprep.subr.mxu0 0.0
    %336 = vmatpush1.msra.mxu0 0.0
    %337 = vmatprep.subr.mxu0 0.0
    %338 = vmatpush1.msra.mxu0 0.0
    %339 = vmatprep.subr.mxu0 0.0
    %340 = vmatpush1.msra.mxu0 0.0
    %341 = vmatprep.subr.mxu0 0.0
    %342 = vmatpush1.msra.mxu0 0.0
    %343 = vmatprep.subr.mxu0 0.0
    %344 = vmatpush1.msra.mxu0 0.0
    %345 = vmatprep.subr.mxu0 0.0
    %346 = vmatpush1.msra.mxu0 0.0
    %347 = vmatprep.subr.mxu0 0.0
    %348 = vmatpush1.msra.mxu0 0.0
    %349 = vmatprep.subr.mxu0 0.0
    %350 = vmatpush1.msra.mxu0 0.0
    %351 = vmatprep.subr.mxu0 0.0
    %352 = vmatpush1.msra.mxu0 0.0
    %353 = vmatprep.subr.mxu0 0.0
    %354 = vmatpush1.msra.mxu0 0.0
    %355 = vmatprep.subr.mxu0 0.0
    %356 = vmatpush1.msra.mxu0 0.0
    %357 = vmatprep.mubr.f32.mxu0 0.0
    %358 = vmatmul.mubr.f32.gmra.mrb[0].mxu0 %v291
    %v359 = vpop.f32.mrb[0].mxu0
    %v360 = vadd.f32 0.0, %v359
    %v361 = vpop.f32.mrb[0].mxu0
    %362 = vdwg.mxu0
    %v363 = vadd.f32 %v153, %v360
    %v364 = vxor.u32 %v363, 2147483648
    %v365 = vmul.f32 %v364, 1.442695
    %v366 = vpow.pop %v365
    %v367 = vadd.f32 %v366, 1.0
    %v368 = vrcp.pop %v367
    %v369 = vmul.f32 1.0, %v368
    %v370 = vtanh.pop %v363
    %v371 = vmul.f32 %v369, %v281
    %373 = vrot.lane.b32.xlu0 %v370, 32
    %v374 = vpop.permute.xlu0 %373
    %v376 = vmul.f32 %v369, %v374
    %378 = vrot.lane.b32.xlu0 %v376, 32
    %v379 = vpop.permute.xlu0 %378
    %v381 = vadd.f32 %v371, %v379
    %v382 = vtanh.pop %v381
    %384 = vrot.lane.b32.xlu0 %v382, 32
    %v385 = vpop.permute.xlu0 %384
    %v387 = vmul.f32 %v369, %v385
    %389 = vrot.lane.b32.xlu0 %v387, 64
    %v390 = vpop.permute.xlu0 %389
    %v391 = vsel %vm56, %v390, 0
    %393 = vmatprep.subr.mxu0 0.0
    %394 = vmatpush1.msra.mxu0 %v186
    %395 = vmatprep.subr.mxu0 0.0
    %396 = vmatpush1.msra.mxu0 %v187
    %397 = vmatprep.subr.mxu0 0.0
    %398 = vmatpush1.msra.mxu0 %v188
    %399 = vmatprep.subr.mxu0 0.0
    %400 = vmatpush1.msra.mxu0 %v189
    %401 = vmatprep.subr.mxu0 0.0
    %402 = vmatpush1.msra.mxu0 0.0
    %403 = vmatprep.subr.mxu0 0.0
    %404 = vmatpush1.msra.mxu0 0.0
    %405 = vmatprep.subr.mxu0 0.0
    %406 = vmatpush1.msra.mxu0 0.0
    %407 = vmatprep.subr.mxu0 0.0
    %408 = vmatpush1.msra.mxu0 0.0
    %409 = vmatprep.subr.mxu0 0.0
    %410 = vmatpush1.msra.mxu0 0.0
    %411 = vmatprep.subr.mxu0 0.0
    %412 = vmatpush1.msra.mxu0 0.0
    %413 = vmatprep.subr.mxu0 0.0
    %414 = vmatpush1.msra.mxu0 0.0
    %415 = vmatprep.subr.mxu0 0.0
    %416 = vmatpush1.msra.mxu0 0.0
    %417 = vmatprep.subr.mxu0 0.0
    %418 = vmatpush1.msra.mxu0 0.0
    %419 = vmatprep.subr.mxu0 0.0
    %420 = vmatpush1.msra.mxu0 0.0
    %421 = vmatprep.subr.mxu0 0.0
    %422 = vmatpush1.msra.mxu0 0.0
    %423 = vmatprep.subr.mxu0 0.0
    %424 = vmatpush1.msra.mxu0 0.0
    %425 = vmatprep.subr.mxu0 0.0
    %426 = vmatpush1.msra.mxu0 0.0
    %427 = vmatprep.subr.mxu0 0.0
    %428 = vmatpush1.msra.mxu0 0.0
    %429 = vmatprep.subr.mxu0 0.0
    %430 = vmatpush1.msra.mxu0 0.0
    %431 = vmatprep.subr.mxu0 0.0
    %432 = vmatpush1.msra.mxu0 0.0
    %433 = vmatprep.subr.mxu0 0.0
    %434 = vmatpush1.msra.mxu0 0.0
    %435 = vmatprep.subr.mxu0 0.0
    %436 = vmatpush1.msra.mxu0 0.0
    %437 = vmatprep.subr.mxu0 0.0
    %438 = vmatpush1.msra.mxu0 0.0
    %439 = vmatprep.subr.mxu0 0.0
    %440 = vmatpush1.msra.mxu0 0.0
    %441 = vmatprep.subr.mxu0 0.0
    %442 = vmatpush1.msra.mxu0 0.0
    %443 = vmatprep.subr.mxu0 0.0
    %444 = vmatpush1.msra.mxu0 0.0
    %445 = vmatprep.subr.mxu0 0.0
    %446 = vmatpush1.msra.mxu0 0.0
    %447 = vmatprep.subr.mxu0 0.0
    %448 = vmatpush1.msra.mxu0 0.0
    %449 = vmatprep.subr.mxu0 0.0
    %450 = vmatpush1.msra.mxu0 0.0
    %451 = vmatprep.subr.mxu0 0.0
    %452 = vmatpush1.msra.mxu0 0.0
    %453 = vmatprep.subr.mxu0 0.0
    %454 = vmatpush1.msra.mxu0 0.0
    %455 = vmatprep.subr.mxu0 0.0
    %456 = vmatpush1.msra.mxu0 0.0
    %457 = vmatprep.mubr.f32.mxu0 0.0
    %458 = vmatmul.mubr.f32.gmra.mrb[0].mxu0 %v391
    %v459 = vpop.f32.mrb[0].mxu0
    %v460 = vadd.f32 0.0, %v459
    %v461 = vpop.f32.mrb[0].mxu0
    %462 = vdwg.mxu0
    %v463 = vadd.f32 %v158, %v460
    %v464 = vxor.u32 %v463, 2147483648
    %v465 = vmul.f32 %v464, 1.442695
    %v466 = vpow.pop %v465
    %v467 = vadd.f32 %v466, 1.0
    %v468 = vrcp.pop %v467
    %v469 = vmul.f32 1.0, %v468
    %v470 = vtanh.pop %v463
    %v471 = vmul.f32 %v469, %v381
    %473 = vrot.lane.b32.xlu0 %v470, 32
    %v474 = vpop.permute.xlu0 %473
    %v476 = vmul.f32 %v469, %v474
    %478 = vrot.lane.b32.xlu0 %v476, 32
    %v479 = vpop.permute.xlu0 %478
    %v481 = vadd.f32 %v471, %v479
    %v482 = vtanh.pop %v481
    %484 = vrot.lane.b32.xlu0 %v482, 32
    %v485 = vpop.permute.xlu0 %484
    %v487 = vmul.f32 %v469, %v485
    %489 = vrot.lane.b32.xlu0 %v487, 64
    %v490 = vpop.permute.xlu0 %489
    %v491 = vsel %vm56, %v490, 0
    %493 = vmatprep.subr.mxu0 0.0
    %494 = vmatpush1.msra.mxu0 %v186
    %495 = vmatprep.subr.mxu0 0.0
    %496 = vmatpush1.msra.mxu0 %v187
    %497 = vmatprep.subr.mxu0 0.0
    %498 = vmatpush1.msra.mxu0 %v188
    %499 = vmatprep.subr.mxu0 0.0
    %500 = vmatpush1.msra.mxu0 %v189
    %501 = vmatprep.subr.mxu0 0.0
    %502 = vmatpush1.msra.mxu0 0.0
    %503 = vmatprep.subr.mxu0 0.0
    %504 = vmatpush1.msra.mxu0 0.0
    %505 = vmatprep.subr.mxu0 0.0
    %506 = vmatpush1.msra.mxu0 0.0
    %507 = vmatprep.subr.mxu0 0.0
    %508 = vmatpush1.msra.mxu0 0.0
    %509 = vmatprep.subr.mxu0 0.0
    %510 = vmatpush1.msra.mxu0 0.0
    %511 = vmatprep.subr.mxu0 0.0
    %512 = vmatpush1.msra.mxu0 0.0
    %513 = vmatprep.subr.mxu0 0.0
    %514 = vmatpush1.msra.mxu0 0.0
    %515 = vmatprep.subr.mxu0 0.0
    %516 = vmatpush1.msra.mxu0 0.0
    %517 = vmatprep.subr.mxu0 0.0
    %518 = vmatpush1.msra.mxu0 0.0
    %519 = vmatprep.subr.mxu0 0.0
    %520 = vmatpush1.msra.mxu0 0.0
    %521 = vmatprep.subr.mxu0 0.0
    %522 = vmatpush1.msra.mxu0 0.0
    %523 = vmatprep.subr.mxu0 0.0
    %524 = vmatpush1.msra.mxu0 0.0
    %525 = vmatprep.subr.mxu0 0.0
    %526 = vmatpush1.msra.mxu0 0.0
    %527 = vmatprep.subr.mxu0 0.0
    %528 = vmatpush1.msra.mxu0 0.0
    %529 = vmatprep.subr.mxu0 0.0
    %530 = vmatpush1.msra.mxu0 0.0
    %531 = vmatprep.subr.mxu0 0.0
    %532 = vmatpush1.msra.mxu0 0.0
    %533 = vmatprep.subr.mxu0 0.0
    %534 = vmatpush1.msra.mxu0 0.0
    %535 = vmatprep.subr.mxu0 0.0
    %536 = vmatpush1.msra.mxu0 0.0
    %537 = vmatprep.subr.mxu0 0.0
    %538 = vmatpush1.msra.mxu0 0.0
    %539 = vmatprep.subr.mxu0 0.0
    %540 = vmatpush1.msra.mxu0 0.0
    %541 = vmatprep.subr.mxu0 0.0
    %542 = vmatpush1.msra.mxu0 0.0
    %543 = vmatprep.subr.mxu0 0.0
    %544 = vmatpush1.msra.mxu0 0.0
    %545 = vmatprep.subr.mxu0 0.0
    %546 = vmatpush1.msra.mxu0 0.0
    %547 = vmatprep.subr.mxu0 0.0
    %548 = vmatpush1.msra.mxu0 0.0
    %549 = vmatprep.subr.mxu0 0.0
    %550 = vmatpush1.msra.mxu0 0.0
    %551 = vmatprep.subr.mxu0 0.0
    %552 = vmatpush1.msra.mxu0 0.0
    %553 = vmatprep.subr.mxu0 0.0
    %554 = vmatpush1.msra.mxu0 0.0
    %555 = vmatprep.subr.mxu0 0.0
    %556 = vmatpush1.msra.mxu0 0.0
    %557 = vmatprep.mubr.f32.mxu0 0.0
    %558 = vmatmul.mubr.f32.gmra.mrb[0].mxu0 %v491
    %v559 = vpop.f32.mrb[0].mxu0
    %v560 = vadd.f32 0.0, %v559
    %v561 = vpop.f32.mrb[0].mxu0
    %562 = vdwg.mxu0
    %v563 = vadd.f32 %v163, %v560
    %v564 = vxor.u32 %v563, 2147483648
    %v565 = vmul.f32 %v564, 1.442695
    %v566 = vpow.pop %v565
    %v567 = vadd.f32 %v566, 1.0
    %v568 = vrcp.pop %v567
    %v569 = vmul.f32 1.0, %v568
    %v570 = vtanh.pop %v563
    %v571 = vmul.f32 %v569, %v481
    %573 = vrot.lane.b32.xlu0 %v570, 32
    %v574 = vpop.permute.xlu0 %573
    %v576 = vmul.f32 %v569, %v574
    %578 = vrot.lane.b32.xlu0 %v576, 32
    %v579 = vpop.permute.xlu0 %578
    %v581 = vadd.f32 %v571, %v579
    %v582 = vtanh.pop %v581
    %584 = vrot.lane.b32.xlu0 %v582, 32
    %v585 = vpop.permute.xlu0 %584
    %v587 = vmul.f32 %v569, %v585
    %589 = vrot.lane.b32.xlu0 %v587, 64
    %v590 = vpop.permute.xlu0 %589
    %v591 = vsel %vm56, %v590, 0
    %593 = vmatprep.subr.mxu0 0.0
    %594 = vmatpush1.msra.mxu0 %v186
    %595 = vmatprep.subr.mxu0 0.0
    %596 = vmatpush1.msra.mxu0 %v187
    %597 = vmatprep.subr.mxu0 0.0
    %598 = vmatpush1.msra.mxu0 %v188
    %599 = vmatprep.subr.mxu0 0.0
    %600 = vmatpush1.msra.mxu0 %v189
    %601 = vmatprep.subr.mxu0 0.0
    %602 = vmatpush1.msra.mxu0 0.0
    %603 = vmatprep.subr.mxu0 0.0
    %604 = vmatpush1.msra.mxu0 0.0
    %605 = vmatprep.subr.mxu0 0.0
    %606 = vmatpush1.msra.mxu0 0.0
    %607 = vmatprep.subr.mxu0 0.0
    %608 = vmatpush1.msra.mxu0 0.0
    %609 = vmatprep.subr.mxu0 0.0
    %610 = vmatpush1.msra.mxu0 0.0
    %611 = vmatprep.subr.mxu0 0.0
    %612 = vmatpush1.msra.mxu0 0.0
    %613 = vmatprep.subr.mxu0 0.0
    %614 = vmatpush1.msra.mxu0 0.0
    %615 = vmatprep.subr.mxu0 0.0
    %616 = vmatpush1.msra.mxu0 0.0
    %617 = vmatprep.subr.mxu0 0.0
    %618 = vmatpush1.msra.mxu0 0.0
    %619 = vmatprep.subr.mxu0 0.0
    %620 = vmatpush1.msra.mxu0 0.0
    %621 = vmatprep.subr.mxu0 0.0
    %622 = vmatpush1.msra.mxu0 0.0
    %623 = vmatprep.subr.mxu0 0.0
    %624 = vmatpush1.msra.mxu0 0.0
    %625 = vmatprep.subr.mxu0 0.0
    %626 = vmatpush1.msra.mxu0 0.0
    %627 = vmatprep.subr.mxu0 0.0
    %628 = vmatpush1.msra.mxu0 0.0
    %629 = vmatprep.subr.mxu0 0.0
    %630 = vmatpush1.msra.mxu0 0.0
    %631 = vmatprep.subr.mxu0 0.0
    %632 = vmatpush1.msra.mxu0 0.0
    %633 = vmatprep.subr.mxu0 0.0
    %634 = vmatpush1.msra.mxu0 0.0
    %635 = vmatprep.subr.mxu0 0.0
    %636 = vmatpush1.msra.mxu0 0.0
    %637 = vmatprep.subr.mxu0 0.0
    %638 = vmatpush1.msra.mxu0 0.0
    %639 = vmatprep.subr.mxu0 0.0
    %640 = vmatpush1.msra.mxu0 0.0
    %641 = vmatprep.subr.mxu0 0.0
    %642 = vmatpush1.msra.mxu0 0.0
    %643 = vmatprep.subr.mxu0 0.0
    %644 = vmatpush1.msra.mxu0 0.0
    %645 = vmatprep.subr.mxu0 0.0
    %646 = vmatpush1.msra.mxu0 0.0
    %647 = vmatprep.subr.mxu0 0.0
    %648 = vmatpush1.msra.mxu0 0.0
    %649 = vmatprep.subr.mxu0 0.0
    %650 = vmatpush1.msra.mxu0 0.0
    %651 = vmatprep.subr.mxu0 0.0
    %652 = vmatpush1.msra.mxu0 0.0
    %653 = vmatprep.subr.mxu0 0.0
    %654 = vmatpush1.msra.mxu0 0.0
    %655 = vmatprep.subr.mxu0 0.0
    %656 = vmatpush1.msra.mxu0 0.0
    %657 = vmatprep.mubr.f32.mxu0 0.0
    %658 = vmatmul.mubr.f32.gmra.mrb[0].mxu0 %v591
    %v659 = vpop.f32.mrb[0].mxu0
    %v660 = vadd.f32 0.0, %v659
    %v661 = vpop.f32.mrb[0].mxu0
    %662 = vdwg.mxu0
    %v663 = vadd.f32 %v168, %v660
    %v664 = vxor.u32 %v663, 2147483648
    %v665 = vmul.f32 %v664, 1.442695
    %v666 = vpow.pop %v665
    %v667 = vadd.f32 %v666, 1.0
    %v668 = vrcp.pop %v667
    %v669 = vmul.f32 1.0, %v668
    %v670 = vtanh.pop %v663
    %v671 = vmul.f32 %v669, %v581
    %673 = vrot.lane.b32.xlu0 %v670, 32
    %v674 = vpop.permute.xlu0 %673
    %v676 = vmul.f32 %v669, %v674
    %678 = vrot.lane.b32.xlu0 %v676, 32
    %v679 = vpop.permute.xlu0 %678
    %v681 = vadd.f32 %v671, %v679
    %v682 = vtanh.pop %v681
    %684 = vrot.lane.b32.xlu0 %v682, 32
    %v685 = vpop.permute.xlu0 %684
    %v687 = vmul.f32 %v669, %v685
    %689 = vrot.lane.b32.xlu0 %v687, 64
    %v690 = vpop.permute.xlu0 %689
    %v691 = vsel %vm56, %v690, 0
    %693 = vmatprep.subr.mxu0 0.0
    %694 = vmatpush1.msra.mxu0 %v186
    %695 = vmatprep.subr.mxu0 0.0
    %696 = vmatpush1.msra.mxu0 %v187
    %697 = vmatprep.subr.mxu0 0.0
    %698 = vmatpush1.msra.mxu0 %v188
    %699 = vmatprep.subr.mxu0 0.0
    %700 = vmatpush1.msra.mxu0 %v189
    %701 = vmatprep.subr.mxu0 0.0
    %702 = vmatpush1.msra.mxu0 0.0
    %703 = vmatprep.subr.mxu0 0.0
    %704 = vmatpush1.msra.mxu0 0.0
    %705 = vmatprep.subr.mxu0 0.0
    %706 = vmatpush1.msra.mxu0 0.0
    %707 = vmatprep.subr.mxu0 0.0
    %708 = vmatpush1.msra.mxu0 0.0
    %709 = vmatprep.subr.mxu0 0.0
    %710 = vmatpush1.msra.mxu0 0.0
    %711 = vmatprep.subr.mxu0 0.0
    %712 = vmatpush1.msra.mxu0 0.0
    %713 = vmatprep.subr.mxu0 0.0
    %714 = vmatpush1.msra.mxu0 0.0
    %715 = vmatprep.subr.mxu0 0.0
    %716 = vmatpush1.msra.mxu0 0.0
    %717 = vmatprep.subr.mxu0 0.0
    %718 = vmatpush1.msra.mxu0 0.0
    %719 = vmatprep.subr.mxu0 0.0
    %720 = vmatpush1.msra.mxu0 0.0
    %721 = vmatprep.subr.mxu0 0.0
    %722 = vmatpush1.msra.mxu0 0.0
    %723 = vmatprep.subr.mxu0 0.0
    %724 = vmatpush1.msra.mxu0 0.0
    %725 = vmatprep.subr.mxu0 0.0
    %726 = vmatpush1.msra.mxu0 0.0
    %727 = vmatprep.subr.mxu0 0.0
    %728 = vmatpush1.msra.mxu0 0.0
    %729 = vmatprep.subr.mxu0 0.0
    %730 = vmatpush1.msra.mxu0 0.0
    %731 = vmatprep.subr.mxu0 0.0
    %732 = vmatpush1.msra.mxu0 0.0
    %733 = vmatprep.subr.mxu0 0.0
    %734 = vmatpush1.msra.mxu0 0.0
    %735 = vmatprep.subr.mxu0 0.0
    %736 = vmatpush1.msra.mxu0 0.0
    %737 = vmatprep.subr.mxu0 0.0
    %738 = vmatpush1.msra.mxu0 0.0
    %739 = vmatprep.subr.mxu0 0.0
    %740 = vmatpush1.msra.mxu0 0.0
    %741 = vmatprep.subr.mxu0 0.0
    %742 = vmatpush1.msra.mxu0 0.0
    %743 = vmatprep.subr.mxu0 0.0
    %744 = vmatpush1.msra.mxu0 0.0
    %745 = vmatprep.subr.mxu0 0.0
    %746 = vmatpush1.msra.mxu0 0.0
    %747 = vmatprep.subr.mxu0 0.0
    %748 = vmatpush1.msra.mxu0 0.0
    %749 = vmatprep.subr.mxu0 0.0
    %750 = vmatpush1.msra.mxu0 0.0
    %751 = vmatprep.subr.mxu0 0.0
    %752 = vmatpush1.msra.mxu0 0.0
    %753 = vmatprep.subr.mxu0 0.0
    %754 = vmatpush1.msra.mxu0 0.0
    %755 = vmatprep.subr.mxu0 0.0
    %756 = vmatpush1.msra.mxu0 0.0
    %757 = vmatprep.mubr.f32.mxu0 0.0
    %758 = vmatmul.mubr.f32.gmra.mrb[0].mxu0 %v691
    %v759 = vpop.f32.mrb[0].mxu0
    %v760 = vadd.f32 0.0, %v759
    %v761 = vpop.f32.mrb[0].mxu0
    %762 = vdwg.mxu0
    %v763 = vadd.f32 %v173, %v760
    %v764 = vxor.u32 %v763, 2147483648
    %v765 = vmul.f32 %v764, 1.442695
    %v766 = vpow.pop %v765
    %v767 = vadd.f32 %v766, 1.0
    %v768 = vrcp.pop %v767
    %v769 = vmul.f32 1.0, %v768
    %v770 = vtanh.pop %v763
    %v771 = vmul.f32 %v769, %v681
    %773 = vrot.lane.b32.xlu0 %v770, 32
    %v774 = vpop.permute.xlu0 %773
    %v776 = vmul.f32 %v769, %v774
    %778 = vrot.lane.b32.xlu0 %v776, 32
    %v779 = vpop.permute.xlu0 %778
    %v781 = vadd.f32 %v771, %v779
    %v782 = vtanh.pop %v781
    %784 = vrot.lane.b32.xlu0 %v782, 32
    %v785 = vpop.permute.xlu0 %784
    %v787 = vmul.f32 %v769, %v785
    %789 = vrot.lane.b32.xlu0 %v787, 64
    %v790 = vpop.permute.xlu0 %789
    %v791 = vsel %vm56, %v790, 0
    %793 = vmatprep.subr.mxu0 0.0
    %794 = vmatpush1.msra.mxu0 %v186
    %795 = vmatprep.subr.mxu0 0.0
    %796 = vmatpush1.msra.mxu0 %v187
    %797 = vmatprep.subr.mxu0 0.0
    %798 = vmatpush1.msra.mxu0 %v188
    %799 = vmatprep.subr.mxu0 0.0
    %800 = vmatpush1.msra.mxu0 %v189
    %801 = vmatprep.subr.mxu0 0.0
    %802 = vmatpush1.msra.mxu0 0.0
    %803 = vmatprep.subr.mxu0 0.0
    %804 = vmatpush1.msra.mxu0 0.0
    %805 = vmatprep.subr.mxu0 0.0
    %806 = vmatpush1.msra.mxu0 0.0
    %807 = vmatprep.subr.mxu0 0.0
    %808 = vmatpush1.msra.mxu0 0.0
    %809 = vmatprep.subr.mxu0 0.0
    %810 = vmatpush1.msra.mxu0 0.0
    %811 = vmatprep.subr.mxu0 0.0
    %812 = vmatpush1.msra.mxu0 0.0
    %813 = vmatprep.subr.mxu0 0.0
    %814 = vmatpush1.msra.mxu0 0.0
    %815 = vmatprep.subr.mxu0 0.0
    %816 = vmatpush1.msra.mxu0 0.0
    %817 = vmatprep.subr.mxu0 0.0
    %818 = vmatpush1.msra.mxu0 0.0
    %819 = vmatprep.subr.mxu0 0.0
    %820 = vmatpush1.msra.mxu0 0.0
    %821 = vmatprep.subr.mxu0 0.0
    %822 = vmatpush1.msra.mxu0 0.0
    %823 = vmatprep.subr.mxu0 0.0
    %824 = vmatpush1.msra.mxu0 0.0
    %825 = vmatprep.subr.mxu0 0.0
    %826 = vmatpush1.msra.mxu0 0.0
    %827 = vmatprep.subr.mxu0 0.0
    %828 = vmatpush1.msra.mxu0 0.0
    %829 = vmatprep.subr.mxu0 0.0
    %830 = vmatpush1.msra.mxu0 0.0
    %831 = vmatprep.subr.mxu0 0.0
    %832 = vmatpush1.msra.mxu0 0.0
    %833 = vmatprep.subr.mxu0 0.0
    %834 = vmatpush1.msra.mxu0 0.0
    %835 = vmatprep.subr.mxu0 0.0
    %836 = vmatpush1.msra.mxu0 0.0
    %837 = vmatprep.subr.mxu0 0.0
    %838 = vmatpush1.msra.mxu0 0.0
    %839 = vmatprep.subr.mxu0 0.0
    %840 = vmatpush1.msra.mxu0 0.0
    %841 = vmatprep.subr.mxu0 0.0
    %842 = vmatpush1.msra.mxu0 0.0
    %843 = vmatprep.subr.mxu0 0.0
    %844 = vmatpush1.msra.mxu0 0.0
    %845 = vmatprep.subr.mxu0 0.0
    %846 = vmatpush1.msra.mxu0 0.0
    %847 = vmatprep.subr.mxu0 0.0
    %848 = vmatpush1.msra.mxu0 0.0
    %849 = vmatprep.subr.mxu0 0.0
    %850 = vmatpush1.msra.mxu0 0.0
    %851 = vmatprep.subr.mxu0 0.0
    %852 = vmatpush1.msra.mxu0 0.0
    %853 = vmatprep.subr.mxu0 0.0
    %854 = vmatpush1.msra.mxu0 0.0
    %855 = vmatprep.subr.mxu0 0.0
    %856 = vmatpush1.msra.mxu0 0.0
    %857 = vmatprep.mubr.f32.mxu0 0.0
    %858 = vmatmul.mubr.f32.gmra.mrb[0].mxu0 %v791
    %v859 = vpop.f32.mrb[0].mxu0
    %v860 = vadd.f32 0.0, %v859
    %v861 = vpop.f32.mrb[0].mxu0
    %862 = vdwg.mxu0
    %v863 = vadd.f32 %v178, %v860
    %v864 = vxor.u32 %v863, 2147483648
    %v865 = vmul.f32 %v864, 1.442695
    %v866 = vpow.pop %v865
    %v867 = vadd.f32 %v866, 1.0
    %v868 = vrcp.pop %v867
    %v869 = vmul.f32 1.0, %v868
    %v870 = vtanh.pop %v863
    %v871 = vmul.f32 %v869, %v781
    %873 = vrot.lane.b32.xlu0 %v870, 32
    %v874 = vpop.permute.xlu0 %873
    %v876 = vmul.f32 %v869, %v874
    %878 = vrot.lane.b32.xlu0 %v876, 32
    %v879 = vpop.permute.xlu0 %878
    %v881 = vadd.f32 %v871, %v879
    %v882 = vtanh.pop %v881
    %884 = vrot.lane.b32.xlu0 %v882, 32
    %v885 = vpop.permute.xlu0 %884
    %v887 = vmul.f32 %v869, %v885
    %889 = vrot.lane.b32.xlu0 %v887, 64
    %v890 = vpop.permute.xlu0 %889
    %v891 = vsel %vm56, %v890, 0
    %893 = vmatprep.subr.mxu0 0.0
    %894 = vmatpush1.msra.mxu0 %v186
    %895 = vmatprep.subr.mxu0 0.0
    %896 = vmatpush1.msra.mxu0 %v187
    %897 = vmatprep.subr.mxu0 0.0
    %898 = vmatpush1.msra.mxu0 %v188
    %899 = vmatprep.subr.mxu0 0.0
    %900 = vmatpush1.msra.mxu0 %v189
    %901 = vmatprep.subr.mxu0 0.0
    %902 = vmatpush1.msra.mxu0 0.0
    %903 = vmatprep.subr.mxu0 0.0
    %904 = vmatpush1.msra.mxu0 0.0
    %905 = vmatprep.subr.mxu0 0.0
    %906 = vmatpush1.msra.mxu0 0.0
    %907 = vmatprep.subr.mxu0 0.0
    %908 = vmatpush1.msra.mxu0 0.0
    %909 = vmatprep.subr.mxu0 0.0
    %910 = vmatpush1.msra.mxu0 0.0
    %911 = vmatprep.subr.mxu0 0.0
    %912 = vmatpush1.msra.mxu0 0.0
    %913 = vmatprep.subr.mxu0 0.0
    %914 = vmatpush1.msra.mxu0 0.0
    %915 = vmatprep.subr.mxu0 0.0
    %916 = vmatpush1.msra.mxu0 0.0
    %917 = vmatprep.subr.mxu0 0.0
    %918 = vmatpush1.msra.mxu0 0.0
    %919 = vmatprep.subr.mxu0 0.0
    %920 = vmatpush1.msra.mxu0 0.0
    %921 = vmatprep.subr.mxu0 0.0
    %922 = vmatpush1.msra.mxu0 0.0
    %923 = vmatprep.subr.mxu0 0.0
    %924 = vmatpush1.msra.mxu0 0.0
    %925 = vmatprep.subr.mxu0 0.0
    %926 = vmatpush1.msra.mxu0 0.0
    %927 = vmatprep.subr.mxu0 0.0
    %928 = vmatpush1.msra.mxu0 0.0
    %929 = vmatprep.subr.mxu0 0.0
    %930 = vmatpush1.msra.mxu0 0.0
    %931 = vmatprep.subr.mxu0 0.0
    %932 = vmatpush1.msra.mxu0 0.0
    %933 = vmatprep.subr.mxu0 0.0
    %934 = vmatpush1.msra.mxu0 0.0
    %935 = vmatprep.subr.mxu0 0.0
    %936 = vmatpush1.msra.mxu0 0.0
    %937 = vmatprep.subr.mxu0 0.0
    %938 = vmatpush1.msra.mxu0 0.0
    %939 = vmatprep.subr.mxu0 0.0
    %940 = vmatpush1.msra.mxu0 0.0
    %941 = vmatprep.subr.mxu0 0.0
    %942 = vmatpush1.msra.mxu0 0.0
    %943 = vmatprep.subr.mxu0 0.0
    %944 = vmatpush1.msra.mxu0 0.0
    %945 = vmatprep.subr.mxu0 0.0
    %946 = vmatpush1.msra.mxu0 0.0
    %947 = vmatprep.subr.mxu0 0.0
    %948 = vmatpush1.msra.mxu0 0.0
    %949 = vmatprep.subr.mxu0 0.0
    %950 = vmatpush1.msra.mxu0 0.0
    %951 = vmatprep.subr.mxu0 0.0
    %952 = vmatpush1.msra.mxu0 0.0
    %953 = vmatprep.subr.mxu0 0.0
    %954 = vmatpush1.msra.mxu0 0.0
    %955 = vmatprep.subr.mxu0 0.0
    %956 = vmatpush1.msra.mxu0 0.0
    %957 = vmatprep.mubr.f32.mxu0 0.0
    %958 = vmatmul.mubr.f32.gmra.mrb[0].mxu0 %v891
    %v959 = vpop.f32.mrb[0].mxu0
    %v960 = vadd.f32 0.0, %v959
    %v961 = vpop.f32.mrb[0].mxu0
    %962 = vdwg.mxu0
    %v963 = vadd.f32 %v183, %v960
    %v964 = vxor.u32 %v963, 2147483648
    %v965 = vmul.f32 %v964, 1.442695
    %v966 = vpow.pop %v965
    %v967 = vadd.f32 %v966, 1.0
    %v968 = vrcp.pop %v967
    %v969 = vmul.f32 1.0, %v968
    %v970 = vtanh.pop %v963
    %v971 = vmul.f32 %v969, %v881
    %973 = vrot.lane.b32.xlu0 %v970, 32
    %v974 = vpop.permute.xlu0 %973
    %v976 = vmul.f32 %v969, %v974
    %978 = vrot.lane.b32.xlu0 %v976, 32
    %v979 = vpop.permute.xlu0 %978
    %v981 = vadd.f32 %v971, %v979
    %v982 = vtanh.pop %v981
    %984 = vrot.lane.b32.xlu0 %v982, 32
    %v985 = vpop.permute.xlu0 %984
    %v987 = vmul.f32 %v969, %v985
    %v988 = vld [vmem:[#allocation2] sm:$0xff]
    %v989 = vld [vmem:[#allocation2 + $0x8] sm:$0xff]
    %v990 = vld [vmem:[#allocation2 + $0x10] sm:$0xff]
    %v991 = vld [vmem:[#allocation2 + $0x18] sm:$0xff]
    %v992 = vld [vmem:[%s5] sm:$0x1]
    %v994 = vlaneseq
    %v995 = vshrl.u32 %v994, 7
    %v996 = vsub.s32 0, %v995
    %v997 = vrot.slane %v992, %v996
    %1000 = vrot.lane.b32.xlu0 %v987, 64
    %v1001 = vpop.permute.xlu0 %1000
    %v1002 = vsel %vm56, %v1001, 0
    %1004 = vmatprep.subr.mxu0 0.0
    %1005 = vmatpush1.msra.mxu0 %v988
    %1006 = vmatprep.subr.mxu0 0.0
    %1007 = vmatpush1.msra.mxu0 %v989
    %1008 = vmatprep.subr.mxu0 0.0
    %1009 = vmatpush1.msra.mxu0 %v990
    %1010 = vmatprep.subr.mxu0 0.0
    %1011 = vmatpush1.msra.mxu0 %v991
    %1012 = vmatprep.subr.mxu0 0.0
    %1013 = vmatpush1.msra.mxu0 0.0
    %1014 = vmatprep.subr.mxu0 0.0
    %1015 = vmatpush1.msra.mxu0 0.0
    %1016 = vmatprep.subr.mxu0 0.0
    %1017 = vmatpush1.msra.mxu0 0.0
    %1018 = vmatprep.subr.mxu0 0.0
    %1019 = vmatpush1.msra.mxu0 0.0
    %1020 = vmatprep.subr.mxu0 0.0
    %1021 = vmatpush1.msra.mxu0 0.0
    %1022 = vmatprep.subr.mxu0 0.0
    %1023 = vmatpush1.msra.mxu0 0.0
    %1024 = vmatprep.subr.mxu0 0.0
    %1025 = vmatpush1.msra.mxu0 0.0
    %1026 = vmatprep.subr.mxu0 0.0
    %1027 = vmatpush1.msra.mxu0 0.0
    %1028 = vmatprep.subr.mxu0 0.0
    %1029 = vmatpush1.msra.mxu0 0.0
    %1030 = vmatprep.subr.mxu0 0.0
    %1031 = vmatpush1.msra.mxu0 0.0
    %1032 = vmatprep.subr.mxu0 0.0
    %1033 = vmatpush1.msra.mxu0 0.0
    %1034 = vmatprep.subr.mxu0 0.0
    %1035 = vmatpush1.msra.mxu0 0.0
    %1036 = vmatprep.subr.mxu0 0.0
    %1037 = vmatpush1.msra.mxu0 0.0
    %1038 = vmatprep.subr.mxu0 0.0
    %1039 = vmatpush1.msra.mxu0 0.0
    %1040 = vmatprep.subr.mxu0 0.0
    %1041 = vmatpush1.msra.mxu0 0.0
    %1042 = vmatprep.subr.mxu0 0.0
    %1043 = vmatpush1.msra.mxu0 0.0
    %1044 = vmatprep.subr.mxu0 0.0
    %1045 = vmatpush1.msra.mxu0 0.0
    %1046 = vmatprep.subr.mxu0 0.0
    %1047 = vmatpush1.msra.mxu0 0.0
    %1048 = vmatprep.subr.mxu0 0.0
    %1049 = vmatpush1.msra.mxu0 0.0
    %1050 = vmatprep.subr.mxu0 0.0
    %1051 = vmatpush1.msra.mxu0 0.0
    %1052 = vmatprep.subr.mxu0 0.0
    %1053 = vmatpush1.msra.mxu0 0.0
    %1054 = vmatprep.subr.mxu0 0.0
    %1055 = vmatpush1.msra.mxu0 0.0
    %1056 = vmatprep.subr.mxu0 0.0
    %1057 = vmatpush1.msra.mxu0 0.0
    %1058 = vmatprep.subr.mxu0 0.0
    %1059 = vmatpush1.msra.mxu0 0.0
    %1060 = vmatprep.subr.mxu0 0.0
    %1061 = vmatpush1.msra.mxu0 0.0
    %1062 = vmatprep.subr.mxu0 0.0
    %1063 = vmatpush1.msra.mxu0 0.0
    %1064 = vmatprep.subr.mxu0 0.0
    %1065 = vmatpush1.msra.mxu0 0.0
    %1066 = vmatprep.subr.mxu0 0.0
    %1067 = vmatpush1.msra.mxu0 0.0
    %1068 = vmatprep.mubr.f32.mxu0 0.0
    %1069 = vmatmul.mubr.f32.gmra.mrb[0].mxu0 %v1002
    %v1070 = vpop.f32.mrb[0].mxu0
    %v1071 = vadd.f32 %v997, %v1070
    %v1072 = vpop.f32.mrb[0].mxu0
    %1073 = vdwg.mxu0
    %1074 = vst [vmem:[%s6] sm:$0xff] %v1071
    // Predicated region
    $region30: #{lstm_classifier.1} parent=1 // pred_check
      _
    $region31: #{lstm_classifier.1} parent=1 // pred_check_branch
      %1076 = sbr.rel (0) target = $region33
    $region32: #{lstm_classifier.1} parent=1 // pred_region
      _
    $region33: #{lstm_classifier.1} parent=1 // pred_fallthru
      _
    // Predicated region
    $region34: #{lstm_classifier.1} parent=1 // pred_check
      _
    $region35: #{lstm_classifier.1} parent=1 // pred_check_branch
      %1078 = sbr.rel (0) target = $region37
    $region36: #{lstm_classifier.1} parent=1 // pred_region
      _
    $region37: #{lstm_classifier.1} parent=1 // pred_fallthru
      _
    %1079 = vsyncpa [#allocation3], 1

</llo_original>
